<compile_context>
chip_gen: v6e
topology: v6e:2x2x1
jax: 0.10.0
libtpu: 0.0.40
codegen_flags: <defaults>
</compile_context>

<pallas_src>
import functools
import math

import jax
import jax.numpy as jnp
from jax.experimental import pallas as pl
from jax.experimental.pallas import tpu as pltpu


# ---------------------------------------------------------------------------
# Kernels (all operate on lane-flattened 2-D blocks)
# ---------------------------------------------------------------------------

def _concat_kernel(x_ref, y_ref, o_ref, *, l1):
    # x:(nt, L1)  y:(nt, L2)  o:(nt, L1+L2). Lane-dense stores, each output
    # element written exactly once.
    o_ref[:, :l1] = x_ref[...].astype(o_ref.dtype)
    o_ref[:, l1:] = y_ref[...].astype(o_ref.dtype)


def _fused_concat_kernel(x_ref, o_ref, *, l1, f):
    # x:(nt, L1)  o:(nt, 2*L1). f applied on the VMEM-resident tile, so f(x)
    # never round-trips through HBM.
    xv = x_ref[...]
    o_ref[:, :l1] = xv.astype(o_ref.dtype)
    o_ref[:, l1:] = f(xv).astype(o_ref.dtype)


def _concat_lane_kernel(x_ref, y_ref, o_ref, *, xt):
    # Lane-tiled fallback (oversized rows). Grid axis 1 walks output lane
    # blocks: blocks [0, xt) come from x, the rest from y.
    j = pl.program_id(1)

    @pl.when(j < xt)
    def _():
        o_ref[...] = x_ref[...].astype(o_ref.dtype)

    @pl.when(j >= xt)
    def _():
        o_ref[...] = y_ref[...].astype(o_ref.dtype)


def _fused_lane_kernel(x_ref, o_ref, *, xt, f):
    j = pl.program_id(1)

    @pl.when(j < xt)
    def _():
        o_ref[...] = x_ref[...].astype(o_ref.dtype)

    @pl.when(j >= xt)
    def _():
        o_ref[...] = f(x_ref[...]).astype(o_ref.dtype)


# ---------------------------------------------------------------------------
# Hardware-aware sizing helpers
# ---------------------------------------------------------------------------

@functools.lru_cache(maxsize=1)
def _device_kind():
    try:
        return jax.devices()[0].device_kind.lower()
    except Exception:
        return ""


@functools.lru_cache(maxsize=1)
def _physical_vmem_bytes():
    try:
        return int(pltpu.get_tpu_info().vmem_capacity_bytes)
    except Exception:
        return (64 << 20) if "v7" in _device_kind() else (128 << 20)


@functools.lru_cache(maxsize=1)
def _num_tensorcores():
    kind = _device_kind()
    if "v7" in kind or "v4" in kind or "v5p" in kind:
        return 2
    try:
        return max(1, int(getattr(jax.devices()[0], "num_cores", 1)))
    except Exception:
        return 1


@functools.lru_cache(maxsize=1)
def _default_budget_bytes():
    """Total VMEM the kernel's (double-buffered) blocks may occupy."""
    kind = _device_kind()
    if "v7" in kind:
        budget = 40 << 20          # 64 MiB physical per TC
    elif "v6" in kind:
        budget = 56 << 20          # 128 MiB physical
    elif "v4" in kind or "v5p" in kind:
        budget = 48 << 20
    else:                          # v5e / unknown: stay conservative
        budget = 13 << 20
    return min(budget, int(_physical_vmem_bytes() * 0.6))


def _vmem_limit(budget):
    phys = _physical_vmem_bytes()
    return int(min(max(budget + (4 << 20), 16 << 20), phys - (2 << 20)))


def _sublane_pack(*dtypes):
    # Second-minor block dim must be a multiple of the sublane packing
    # (8 for 4-byte, 16 for 2-byte, 32 for 1-byte) unless it spans the array.
    p = 8
    for dt in dtypes:
        p = max(p, 8 * max(1, 4 // jnp.dtype(dt).itemsize))
    return p


def _pick_rows(n, per_row_db_bytes, budget, packing, cores):
    """Rows per block for the N-only tiling. 0 => a single row overflows."""
    cap = budget // max(1, per_row_db_bytes)
    if cap < 1:
        return 0
    if cores >= 2 and n >= 2 * packing:
        cap = min(cap, (n + 1) // 2)   # leave >=2 grid steps for megacore
    if cap >= n:
        return n                       # whole array in one (full-extent) block
    if cap < packing:
        return 0
    return (cap // packing) * packing


def _pick_lane_tile(l1, per_lane_db_bytes, budget):
    """Largest multiple-of-128 divisor of l1 whose blocks fit the budget."""
    if l1 % 128 != 0:
        return None
    cap = max(128, budget // max(1, per_lane_db_bytes))
    base = l1 // 128
    best = None
    d = 1
    while d * d <= base:
        if base % d == 0:
            for q in (d, base // d):
                lt = q * 128
                if lt <= cap and (best is None or lt > best):
                    best = lt
        d += 1
    return best


# ---------------------------------------------------------------------------
# pallas_call builders
# ---------------------------------------------------------------------------

def _concat_pallas(x2, y2, out_dtype, *, budget, cores):
    n, l1 = x2.shape
    _, l2 = y2.shape
    lo = l1 + l2
    xi = jnp.dtype(x2.dtype).itemsize
    yi = jnp.dtype(y2.dtype).itemsize
    oi = jnp.dtype(out_dtype).itemsize
    packing = _sublane_pack(x2.dtype, y2.dtype, out_dtype)
    per_row_db = 2 * (l1 * xi + l2 * yi + lo * oi)   # double-buffered
    nt = _pick_rows(n, per_row_db, budget, packing, cores)

    cost = pl.CostEstimate(flops=0, transcendentals=0,
                           bytes_accessed=n * (l1 * xi + l2 * yi + lo * oi))
    out_shape = jax.ShapeDtypeStruct((n, lo), out_dtype)
    vmem_limit = _vmem_limit(budget)

    lt = None
    if nt == 0:
        nt = n if n <= packing else packing
        lt = _pick_lane_tile(l1, 2 * nt * (xi + yi + oi), budget)

    if lt is None:
        # Row-tiled, full-lane (flattened) blocks.
        # TODO(synk): if the row overflowed the budget and l1 is not a multiple
        # of 128 there is no valid lane tile; use whole-row blocks with a
        # raised VMEM limit instead.
        vmem_limit = max(vmem_limit,
                         min(_physical_vmem_bytes() - (2 << 20),
                             per_row_db * nt + (4 << 20)))
        return pl.pallas_call(
            functools.partial(_concat_kernel, l1=l1),
            out_shape=out_shape,
            grid_spec=pltpu.PrefetchScalarGridSpec(
                num_scalar_prefetch=0,
                grid=(pl.cdiv(n, nt),),
                in_specs=[pl.BlockSpec((nt, l1), lambda i: (i, 0)),
                          pl.BlockSpec((nt, l2), lambda i: (i, 0))],
                out_specs=pl.BlockSpec((nt, lo), lambda i: (i, 0)),
            ),
            compiler_params=pltpu.CompilerParams(
                dimension_semantics=("parallel",),
                vmem_limit_bytes=vmem_limit,
                allow_input_fusion=[False, True]),
            cost_estimate=cost,
        )(x2, y2)

    # Oversized rows: add a lane-axis grid. Output lane blocks [0, xt) are
    # copies of x's blocks, the rest are y's; input block indices are clamped
    # in the region where they are unused so no extra DMA is issued.
    xt = l1 // lt
    grid = (pl.cdiv(n, nt), xt + pl.cdiv(l2, lt))
    return pl.pallas_call(
        functools.partial(_concat_lane_kernel, xt=xt),
        out_shape=out_shape,
        grid_spec=pltpu.PrefetchScalarGridSpec(
            num_scalar_prefetch=0,
            grid=grid,
            in_specs=[
                pl.BlockSpec((nt, lt),
                             lambda i, j, xt=xt: (i, jnp.minimum(j, xt - 1))),
                pl.BlockSpec((nt, lt),
                             lambda i, j, xt=xt: (i, jnp.maximum(j - xt, 0))),
            ],
            out_specs=pl.BlockSpec((nt, lt), lambda i, j: (i, j)),
        ),
        compiler_params=pltpu.CompilerParams(
            dimension_semantics=("parallel", "parallel"),
            vmem_limit_bytes=vmem_limit,
            allow_input_fusion=[False, True]),
        cost_estimate=cost,
    )(x2, y2)


def _fused_pallas(x2, f, out_dtype, *, budget, cores):
    n, l1 = x2.shape
    lo = 2 * l1
    xi = jnp.dtype(x2.dtype).itemsize
    oi = jnp.dtype(out_dtype).itemsize
    packing = _sublane_pack(x2.dtype, out_dtype)
    per_row_db = 2 * (l1 * xi + lo * oi)
    nt = _pick_rows(n, per_row_db, budget, packing, cores)

    cost = pl.CostEstimate(flops=0, transcendentals=0,
                           bytes_accessed=n * (l1 * xi + lo * oi))
    out_shape = jax.ShapeDtypeStruct((n, lo), out_dtype)
    vmem_limit = _vmem_limit(budget)

    lt = None
    if nt == 0:
        nt = n if n <= packing else packing
        lt = _pick_lane_tile(l1, 2 * nt * (xi + oi), budget)

    if lt is None:
        vmem_limit = max(vmem_limit,
                         min(_physical_vmem_bytes() - (2 << 20),
                             per_row_db * nt + (4 << 20)))
        return pl.pallas_call(
            functools.partial(_fused_concat_kernel, l1=l1, f=f),
            out_shape=out_shape,
            grid_spec=pltpu.PrefetchScalarGridSpec(
                num_scalar_prefetch=0,
                grid=(pl.cdiv(n, nt),),
                in_specs=[pl.BlockSpec((nt, l1), lambda i: (i, 0))],
                out_specs=pl.BlockSpec((nt, lo), lambda i: (i, 0)),
            ),
            compiler_params=pltpu.CompilerParams(
                dimension_semantics=("parallel",),
                vmem_limit_bytes=vmem_limit),
            cost_estimate=cost,
        )(x2)

    # Oversized rows: lane-tiled fallback. The second half of the output lane
    # axis re-reads x's blocks (still cheaper than materializing f(x) in HBM).
    xt = l1 // lt
    grid = (pl.cdiv(n, nt), 2 * xt)
    return pl.pallas_call(
        functools.partial(_fused_lane_kernel, xt=xt, f=f),
        out_shape=out_shape,
        grid_spec=pltpu.PrefetchScalarGridSpec(
            num_scalar_prefetch=0,
            grid=grid,
            in_specs=[pl.BlockSpec(
                (nt, lt),
                lambda i, j, xt=xt: (i, jnp.where(j < xt, j, j - xt)))],
            out_specs=pl.BlockSpec((nt, lt), lambda i, j: (i, j)),
        ),
        compiler_params=pltpu.CompilerParams(
            dimension_semantics=("parallel", "parallel"),
            vmem_limit_bytes=vmem_limit),
        cost_estimate=cost,
    )(x2)


# ---------------------------------------------------------------------------
# Public wrapper
# ---------------------------------------------------------------------------

def shortcut1(x, f, dim=1, *, fuse_elementwise=False, max_block_bytes=None):
    """Pallas equivalent of Shortcut1(f, dim).forward(x) = concat([x, f(x)], dim)."""
    dim = dim % x.ndim
    shape = x.shape
    n = int(math.prod(shape[:dim]))          # 1 if no leading dims
    c1 = int(shape[dim])
    m = int(math.prod(shape[dim + 1:]))      # 1 if no trailing dims
    l1 = c1 * m

    budget = int(max_block_bytes) if max_block_bytes else _default_budget_bytes()
    cores = _num_tensorcores()

    if fuse_elementwise:
        # f must be an elementwise, shape-preserving function (c2 == c1);
        # verify the shape contract before fusing it into the kernel.
        f_out = jax.eval_shape(f, jax.ShapeDtypeStruct(x.shape, x.dtype))
        assert f_out.shape == x.shape, (x.shape, f_out.shape)
        out_dtype = jnp.result_type(x.dtype, f_out.dtype)
        out = _fused_pallas(x.reshape(n, l1), f, out_dtype,
                            budget=budget, cores=cores)
        return out.reshape(shape[:dim] + (2 * c1,) + shape[dim + 1:])

    # General path: arbitrary (JAX-traceable) f runs under XLA; the Pallas
    # kernel performs the concatenation, and allow_input_fusion lets XLA fuse
    # the producer of y = f(x) into the pallas_call operand.
    y = f(x)
    assert x.shape[:dim] == y.shape[:dim], (x.shape, y.shape)
    assert x.shape[dim + 1:] == y.shape[dim + 1:], (x.shape, y.shape)
    c2 = int(y.shape[dim])
    # Like modern torch.cat, mixed input dtypes follow type promotion.
    out_dtype = jnp.result_type(x.dtype, y.dtype)
    out = _concat_pallas(x.reshape(n, l1), y.reshape(n, c2 * m), out_dtype,
                         budget=budget, cores=cores)
    return out.reshape(shape[:dim] + (c1 + c2,) + shape[dim + 1:])


# ---------------------------------------------------------------------------
# Demo / self-check
# ---------------------------------------------------------------------------

if __name__ == "__main__":
    key = jax.random.PRNGKey(0)
    # NCHW input, Shortcut1 default dim=1 (channels).
    x = jax.random.normal(key, (2, 4, 16, 16), dtype=jnp.float32)
    f = jnp.tanh  # example shape-preserving branch module

    ref = jnp.concatenate([x, jnp.tanh(x)], axis=1)

    # Fused path: f applied inside the kernel on the VMEM tile.
    y_fused = jax.block_until_ready(shortcut1(x, f, dim=1, fuse_elementwise=True))
    # General path: f computed outside, Pallas kernel does the concat.
    y_gen = jax.block_until_ready(shortcut1(x, f, dim=1, fuse_elementwise=False))
    # Force the lane-tiled fallback (oversized-row case) on both paths.
    y_fused_lt = jax.block_until_ready(
        shortcut1(x, f, dim=1, fuse_elementwise=True, max_block_bytes=16 * 1024))
    y_gen_lt = jax.block_until_ready(
        shortcut1(x, f, dim=1, fuse_elementwise=False, max_block_bytes=16 * 1024))

    # Concatenation along the last axis (m == 1) also goes through the
    # flattened lane layout.
    x2d = jax.random.normal(key, (8, 32), dtype=jnp.float32)
    y2d = jax.block_until_ready(shortcut1(x2d, f, dim=-1))
    ref2d = jnp.concatenate([x2d, jnp.tanh(x2d)], axis=-1)

    for got, want in ((y_fused, ref), (y_gen, ref), (y_fused_lt, ref),
                      (y_gen_lt, ref), (y2d, ref2d)):
        assert got.shape == want.shape, (got.shape, want.shape)
        assert got.dtype == want.dtype, (got.dtype, want.dtype)
        assert jnp.allclose(got, want, atol=1e-6, rtol=1e-6)

    print("KERNEL_OK")
</pallas_src>

<mosaic_0001>
module attributes {stable_mosaic.version = 11 : i64} {
  func.func @_fused_concat_kernel(%arg0: i32, %arg1: memref<2x1024xf32, #tpu.memory_space<vmem>>, %arg2: memref<2x2048xf32, #tpu.memory_space<vmem>>) attributes {dimension_semantics = [#tpu.dimension_semantics<parallel>], iteration_bounds = array<i64: 1>, scalar_prefetch = 0 : i64, scratch_operands = 0 : i64, tpu.core_type = #tpu.core_type<tc>, window_params = [{transform_indices = @transform_0, window_bounds = array<i64: 2, 1024>}, {transform_indices = @transform_1, window_bounds = array<i64: 2, 2048>}]} {
    %c0 = arith.constant 0 : index
    %c0_0 = arith.constant 0 : index
    %0 = vector.load %arg1[%c0, %c0_0] : memref<2x1024xf32, #tpu.memory_space<vmem>>, vector<2x1024xf32>
    %c0_1 = arith.constant 0 : index
    %c0_2 = arith.constant 0 : index
    %1 = vector.load %arg2[%c0_1, %c0_2] : memref<2x2048xf32, #tpu.memory_space<vmem>>, vector<2x1024xf32>
    tpu.vector_store %arg2[%c0_1, %c0_2], %0 {strides = array<i32>} : memref<2x2048xf32, #tpu.memory_space<vmem>>, vector<2x1024xf32>,
    %2 = math.tanh %0 : vector<2x1024xf32>
    %c0_3 = arith.constant 0 : index
    %c1024 = arith.constant 1024 : index
    %3 = vector.load %arg2[%c0_3, %c1024] : memref<2x2048xf32, #tpu.memory_space<vmem>>, vector<2x1024xf32>
    tpu.vector_store %arg2[%c0_3, %c1024], %2 {strides = array<i32>} : memref<2x2048xf32, #tpu.memory_space<vmem>>, vector<2x1024xf32>,
    return
  }
  func.func @transform_0(%arg0: i32) -> (i32, i32) {
    %c0_i32 = arith.constant 0 : i32
    %c0_i32_0 = arith.constant 0 : i32
    return %arg0, %c0_i32 : i32, i32
  }
  func.func @transform_1(%arg0: i32) -> (i32, i32) {
    %c0_i32 = arith.constant 0 : i32
    %c0_i32_0 = arith.constant 0 : i32
    return %arg0, %c0_i32 : i32, i32
  }
}

</mosaic_0001>

<llo_original>
// kernel: tpu_custom_call.1
$region0: #{tpu_custom_call.1}
  #allocation0 [shape = 'u32[]', space=smem, size = 0x4, offset = 0x4, fixed_abs, tag = 'smem constant byte address 0x4 - core index']
  #allocation1 [shape = 'u32[144,128]{1,0:T(1,128)}', space=vmem, size = 0x12000, scoped, tag = 'internal scratch']
  %s0 = inlined_call_operand.hbm [shape: f32[2,1024], index: 0, kind: input, shape index: {}]
  %s1 = inlined_call_operand.hbm [shape: f32[2,2048], index: 1, kind: output, shape index: {}]
  %s2 = sld [smem:[#allocation0]]
  $region18: #{tpu_custom_call.1} parent=0
    _
  %s4 = ssub.s32 1, %s2
  %s5 = scalar_select 0, %s4, %s2
  $region1: #{tpu_custom_call.1} parent=0
    #allocation2 [shape = 'u8[8192]{0}', space=vmem, size = 0x2000, scoped, tag = 'input window, operand 0, single buffered']
    #allocation3 [shape = 's32[1]{0}', space=sflag, size = 0x4, scoped, tag = 'scoped memory for tpu_custom_call.1']
    #allocation4 [shape = 's32[1]{0}', space=sflag, size = 0x4, scoped, tag = 'scoped memory for tpu_custom_call.1']
    #allocation5 [shape = 'u8[16384]{0}', space=vmem, size = 0x4000, scoped, tag = 'output window, operand 0, single buffered']
    %6 = vsyncpa [#allocation3], 0
    %7 = vsyncpa [#allocation4], 0
    // Predicated region
    $region2: #{tpu_custom_call.1} parent=1 // pred_check
      _
    $region3: #{tpu_custom_call.1} parent=1 // pred_check_branch
      %9 = sbr.rel (0) target = $region5
    $region4: #{tpu_custom_call.1} parent=1 // pred_region
      %s11 = ssub.s32 256, 256
      %12 = vsyncadd [#allocation3], %s11
      %s14 = sshll.u32 [#allocation2], 4
      %s15 = int_to_ptr.vmem [resolvable:$true] %s14
      %17 = dma.hbm_to_vmem [thread:$0]  %s0, 256, %s15, [#allocation3]
    $region5: #{tpu_custom_call.1} parent=1 // pred_fallthru
      _
    // Predicated region
    $region6: #{tpu_custom_call.1} parent=1 // pred_check
      _
    $region7: #{tpu_custom_call.1} parent=1 // pred_check_branch
      %19 = sbr.rel (0) target = $region9
    $region8: #{tpu_custom_call.1} parent=1 // pred_region
      %20 = dma.done [#allocation3], 256
    $region9: #{tpu_custom_call.1} parent=1 // pred_fallthru
      _
    %v21 = vld [vmem:[#allocation2] sm:$0xff]
    %v22 = vld [vmem:[#allocation2 + $0x8] sm:$0xff]
    %23 = vst [vmem:[#allocation5] sm:$0xff] %v21
    %24 = vst [vmem:[#allocation5 + $0x8] sm:$0xff] %v22
    %v25 = vtanh.pop %v21
    %v26 = vtanh.pop %v22
    %27 = vst [vmem:[#allocation5 + $0x10] sm:$0xff] %v25
    %28 = vst [vmem:[#allocation5 + $0x18] sm:$0xff] %v26
    // Predicated region
    $region10: #{tpu_custom_call.1} parent=1 // pred_check
      _
    $region11: #{tpu_custom_call.1} parent=1 // pred_check_branch
      %30 = sbr.rel (0) target = $region13
    $region12: #{tpu_custom_call.1} parent=1 // pred_region
      %s32 = ssub.s32 512, 512
      %33 = vsyncadd [#allocation4], %s32
      %s35 = sshll.u32 [#allocation5], 4
      %s36 = int_to_ptr.vmem [resolvable:$true] %s35
      %38 = dma.vmem_to_hbm [thread:$0]  %s36, 512, %s1, [#allocation4]
    $region13: #{tpu_custom_call.1} parent=1 // pred_fallthru
      _
    // Predicated region
    $region14: #{tpu_custom_call.1} parent=1 // pred_check
      _
    $region15: #{tpu_custom_call.1} parent=1 // pred_check_branch
      %40 = sbr.rel (0) target = $region17
    $region16: #{tpu_custom_call.1} parent=1 // pred_region
      %41 = dma.done [#allocation4], 512
    $region17: #{tpu_custom_call.1} parent=1 // pred_fallthru
      _
    %42 = vsyncpa [#allocation3], 1
    %43 = vsyncpa [#allocation4], 1

</llo_original>
